<compile_context>
chip_gen: v7x
topology: tpu7x:2x2x1
jax: 0.10.0
libtpu: 0.0.40
codegen_flags: <defaults>
</compile_context>

<pallas_src>
import functools

import jax
import jax.numpy as jnp
from jax.experimental import pallas as pl
from jax.experimental.pallas import tpu as pltpu


def _round_up(x, m):
    return ((x + m - 1) // m) * m


def _auto_block_b(state_dim, hidden_dim):
    """Batch tile: ~1.5 MiB of state per grid step, capped so each (H, block_b)
    f32 activation plane stays <= ~8 MiB of VMEM."""
    target_bytes = 3 << 19                      # ~1.5 MiB of x per step
    bb = max(512, _round_up(target_bytes // max(state_dim * 4, 1), 128))
    feat = max(hidden_dim, state_dim, 1)
    cap = max(128, ((8 << 20) // (feat * 4)) // 128 * 128)
    return min(bb, cap, 32768)


def _vmem_estimate_bytes(state_dim, hidden_dim, block_b, single_buffer_weights):
    """Rough VMEM budget (f32) used only to decide whether to raise the
    default scoped-VMEM limit."""
    f = 4
    hs = _round_up(hidden_dim, 8)
    hl = _round_up(hidden_dim, 128)
    sl = _round_up(state_dim, 128)
    wbuf = 1 if single_buffer_weights else 2
    x_blk = 2 * _round_up(state_dim, 8) * block_b * f       # double-buffered x tile
    o_blk = 2 * 8 * block_b * f                              # double-buffered out tile
    w_tot = wbuf * (hs * sl + 2 * hs * hl + 8 * hl) * f      # resident weights
    b_tot = wbuf * 3 * hs * 128 * f                          # resident bias columns
    acts = 3 * hs * block_b * f                              # live hT temporaries
    return x_blk + o_blk + w_tot + b_tot + acts


def _critic_kernel(x_ref,
                   w1_ref, b1_ref,
                   w2_ref, b2_ref,
                   w3_ref, b3_ref,
                   w4_ref, b4_ref,
                   o_ref):
    # Everything stays transposed: features on sublanes, batch on lanes.
    xT = x_ref[...]                                                   # (S, bb)
    # Layer 1: (H, S) @ (S, bb) -> (H, bb), bias column broadcast over lanes.
    h = jnp.dot(w1_ref[...], xT, preferred_element_type=jnp.float32)
    h = jnp.maximum(h + b1_ref[...], 0.0)
    # Layer 2.
    h = jnp.dot(w2_ref[...], h, preferred_element_type=jnp.float32)
    h = jnp.maximum(h + b2_ref[...], 0.0)
    # Layer 3.
    h = jnp.dot(w3_ref[...], h, preferred_element_type=jnp.float32)
    h = jnp.maximum(h + b3_ref[...], 0.0)
    # Head: (1, H) @ (H, bb) -> (1, bb); lane-dense output block.
    v = jnp.dot(w4_ref[...], h, preferred_element_type=jnp.float32)
    o_ref[...] = (v + b4_ref[0]).astype(o_ref.dtype)                  # SMEM scalar bias


@functools.partial(jax.jit, static_argnames=("block_b",))
def critic_forward(state, params, *, block_b=None):
    """state: (B, state_dim) float32 -> value: (B, 1) float32."""
    (w1, b1), (w2, b2), (w3, b3), (w4, b4) = params
    B, state_dim = state.shape
    H = w1.shape[1]

    # Transposed operands for the features-on-sublanes / batch-on-lanes kernel.
    xT = jnp.transpose(state)                                   # (S, B)
    w1t, w2t, w3t, w4t = (jnp.transpose(w) for w in (w1, w2, w3, w4))  # (out, in)
    b1c, b2c, b3c = (jnp.transpose(b) for b in (b1, b2, b3))    # (H, 1) columns
    b4s = jnp.reshape(b4, (1,))                                 # scalar -> SMEM

    # --- batch tile selection -------------------------------------------------
    if block_b is None:
        block_b = _auto_block_b(state_dim, H)
    else:
        block_b = max(128, _round_up(int(block_b), 128))

    if B <= 128:
        # Single full-array block (any size equal to the array dim is legal).
        block_b_eff = B
    else:
        # >= 2 lane-aligned grid steps so the "parallel" batch axis can shard
        # across both TensorCores on v7x, each step still moving a big tile.
        block_b_eff = min(block_b, max(128, _round_up(pl.cdiv(B, 2), 128)))

    num_blocks = pl.cdiv(B, block_b_eff)
    b_pad = num_blocks * block_b_eff

    # --- VMEM hygiene for large H (inert at the test sizes) --------------------
    weight_bytes = 4 * (w1.size + w2.size + w3.size + w4.size)
    single_buffer_weights = weight_bytes > (4 << 20)
    wmode = pl.Buffered(1) if single_buffer_weights else None   # constant index maps

    def resident(arr):
        nd = arr.ndim
        return pl.BlockSpec(arr.shape, lambda *_: (0,) * nd, pipeline_mode=wmode)

    est = _vmem_estimate_bytes(state_dim, H, block_b_eff, single_buffer_weights)
    cp_kwargs = {"dimension_semantics": ("parallel",)}
    if est > (30 << 20):
        cp_kwargs["vmem_limit_bytes"] = int(min(est * 5 // 4 + (4 << 20), 128 << 20))

    out = pl.pallas_call(
        _critic_kernel,
        out_shape=jax.ShapeDtypeStruct((1, b_pad), jnp.float32),
        grid_spec=pltpu.PrefetchScalarGridSpec(
            num_scalar_prefetch=0,
            grid=(num_blocks,),
            in_specs=[
                pl.BlockSpec((state_dim, block_b_eff), lambda i: (0, i)),
                resident(w1t), resident(b1c),
                resident(w2t), resident(b2c),
                resident(w3t), resident(b3c),
                resident(w4t),
                pl.BlockSpec(memory_space=pltpu.MemorySpace.SMEM),
            ],
            out_specs=pl.BlockSpec((1, block_b_eff), lambda i: (0, i)),
        ),
        compiler_params=pltpu.CompilerParams(**cp_kwargs),
    )(xT, w1t, b1c, w2t, b2c, w3t, b3c, w4t, b4s)

    # Lane-dense (1, b_pad) kernel output -> (B, 1) module output.
    return jnp.reshape(out[0, :B], (B, 1))


def init_critic_params(key, state_dim, hidden_dim):
    """Deterministic PyTorch-style init: U(-1/sqrt(fan_in), 1/sqrt(fan_in)).

    Weights are returned as (in, out); biases as (1, out)."""
    dims = [(state_dim, hidden_dim),
            (hidden_dim, hidden_dim),
            (hidden_dim, hidden_dim),
            (hidden_dim, 1)]
    params = []
    for (fan_in, fan_out) in dims:
        key, kw, kb = jax.random.split(key, 3)
        bound = 1.0 / jnp.sqrt(jnp.float32(fan_in))
        w = jax.random.uniform(kw, (fan_in, fan_out), jnp.float32, -bound, bound)
        b = jax.random.uniform(kb, (1, fan_out), jnp.float32, -bound, bound)
        params.append((w, b))
    return params


def critic_ref(state, params):
    """Pure-JAX reference of the same MLP, for correctness checks."""
    (w1, b1), (w2, b2), (w3, b3), (w4, b4) = params
    h = jnp.maximum(state @ w1 + b1, 0.0)
    h = jnp.maximum(h @ w2 + b2, 0.0)
    h = jnp.maximum(h @ w3 + b3, 0.0)
    return h @ w4 + b4


if __name__ == "__main__":
    key = jax.random.PRNGKey(0)
    k_params, k_state, k_state2 = jax.random.split(key, 3)

    B, STATE_DIM, HIDDEN_DIM = 8, 16, 32
    params = init_critic_params(k_params, STATE_DIM, HIDDEN_DIM)

    # Small batch: single full-array block path.
    state = jax.random.normal(k_state, (B, STATE_DIM), jnp.float32)
    value = jax.block_until_ready(critic_forward(state, params))
    ref = critic_ref(state, params)
    assert value.shape == (B, 1), value.shape
    assert jnp.allclose(value, ref, atol=1e-4, rtol=1e-4), (
        f"max abs err = {jnp.max(jnp.abs(value - ref))}")

    # Moderate batch, not a multiple of the tile: exercises the multi-step
    # grid (2 steps -> sharded across TCs on v7x) and the padded last tile.
    B2 = 300
    state2 = jax.random.normal(k_state2, (B2, STATE_DIM), jnp.float32)
    value2 = jax.block_until_ready(critic_forward(state2, params))
    ref2 = critic_ref(state2, params)
    assert value2.shape == (B2, 1), value2.shape
    assert jnp.allclose(value2, ref2, atol=1e-4, rtol=1e-4), (
        f"max abs err = {jnp.max(jnp.abs(value2 - ref2))}")

    # Explicit small tile: exercises the B > block_b multi-block path.
    value3 = jax.block_until_ready(critic_forward(state2, params, block_b=128))
    assert jnp.allclose(value3, ref2, atol=1e-4, rtol=1e-4), (
        f"max abs err = {jnp.max(jnp.abs(value3 - ref2))}")

    print("KERNEL_OK")
</pallas_src>

<mosaic_0001>
module attributes {stable_mosaic.version = 11 : i64} {
  func.func @_critic_kernel(%arg0: i32, %arg1: memref<16x8xf32, #tpu.memory_space<vmem>>, %arg2: memref<32x16xf32, #tpu.memory_space<vmem>>, %arg3: memref<32x1xf32, #tpu.memory_space<vmem>>, %arg4: memref<32x32xf32, #tpu.memory_space<vmem>>, %arg5: memref<32x1xf32, #tpu.memory_space<vmem>>, %arg6: memref<32x32xf32, #tpu.memory_space<vmem>>, %arg7: memref<32x1xf32, #tpu.memory_space<vmem>>, %arg8: memref<1x32xf32, #tpu.memory_space<vmem>>, %arg9: memref<1xf32, #tpu.memory_space<smem>>, %arg10: memref<1x8xf32, #tpu.memory_space<vmem>>) attributes {dimension_semantics = [#tpu.dimension_semantics<parallel>], iteration_bounds = array<i64: 1>, scalar_prefetch = 0 : i64, scratch_operands = 0 : i64, tpu.core_type = #tpu.core_type<tc>, window_params = [{transform_indices = @transform_0, window_bounds = array<i64: 16, 8>}, {pipeline_mode = #tpu.pipeline_mode<synchronous>, transform_indices = @transform_1, window_bounds = array<i64: 32, 16>}, {pipeline_mode = #tpu.pipeline_mode<synchronous>, transform_indices = @transform_2, window_bounds = array<i64: 32, 1>}, {pipeline_mode = #tpu.pipeline_mode<synchronous>, transform_indices = @transform_3, window_bounds = array<i64: 32, 32>}, {pipeline_mode = #tpu.pipeline_mode<synchronous>, transform_indices = @transform_4, window_bounds = array<i64: 32, 1>}, {pipeline_mode = #tpu.pipeline_mode<synchronous>, transform_indices = @transform_5, window_bounds = array<i64: 32, 32>}, {pipeline_mode = #tpu.pipeline_mode<synchronous>, transform_indices = @transform_6, window_bounds = array<i64: 32, 1>}, {pipeline_mode = #tpu.pipeline_mode<synchronous>, transform_indices = @transform_7, window_bounds = array<i64: 1, 32>}, {transform_indices = @transform_8, window_bounds = array<i64: 1>}, {transform_indices = @transform_9, window_bounds = array<i64: 1, 8>}]} {
    %c0 = arith.constant 0 : index
    %c0_0 = arith.constant 0 : index
    %0 = vector.load %arg1[%c0, %c0_0] : memref<16x8xf32, #tpu.memory_space<vmem>>, vector<16x8xf32>
    %c0_1 = arith.constant 0 : index
    %c0_2 = arith.constant 0 : index
    %1 = vector.load %arg2[%c0_1, %c0_2] : memref<32x16xf32, #tpu.memory_space<vmem>>, vector<32x16xf32>
    %cst = arith.constant dense<0.000000e+00> : vector<32x8xf32>
    %2 = tpu.matmul %1, %0, %cst {dimension_numbers = #tpu.dot_dimension_numbers<[1], [0], [0], [1], [0, 0, 1, 1], [], []>} : vector<32x16xf32>, vector<16x8xf32>, vector<32x8xf32> -> vector<32x8xf32>
    %c0_3 = arith.constant 0 : index
    %c0_4 = arith.constant 0 : index
    %3 = vector.load %arg3[%c0_3, %c0_4] : memref<32x1xf32, #tpu.memory_space<vmem>>, vector<32x1xf32>
    %4 = vector.broadcast %3 : vector<32x1xf32> to vector<32x8xf32>
    %5 = arith.addf %2, %4 : vector<32x8xf32>
    %cst_5 = arith.constant 0.000000e+00 : f32
    %6 = vector.broadcast %cst_5 : f32 to vector<32x8xf32>
    %7 = arith.maximumf %5, %6 : vector<32x8xf32>
    %c0_6 = arith.constant 0 : index
    %c0_7 = arith.constant 0 : index
    %8 = vector.load %arg4[%c0_6, %c0_7] : memref<32x32xf32, #tpu.memory_space<vmem>>, vector<32x32xf32>
    %cst_8 = arith.constant dense<0.000000e+00> : vector<32x8xf32>
    %9 = tpu.matmul %8, %7, %cst_8 {dimension_numbers = #tpu.dot_dimension_numbers<[1], [0], [0], [1], [0, 0, 1, 1], [], []>} : vector<32x32xf32>, vector<32x8xf32>, vector<32x8xf32> -> vector<32x8xf32>
    %c0_9 = arith.constant 0 : index
    %c0_10 = arith.constant 0 : index
    %10 = vector.load %arg5[%c0_9, %c0_10] : memref<32x1xf32, #tpu.memory_space<vmem>>, vector<32x1xf32>
    %11 = vector.broadcast %10 : vector<32x1xf32> to vector<32x8xf32>
    %12 = arith.addf %9, %11 : vector<32x8xf32>
    %cst_11 = arith.constant 0.000000e+00 : f32
    %13 = vector.broadcast %cst_11 : f32 to vector<32x8xf32>
    %14 = arith.maximumf %12, %13 : vector<32x8xf32>
    %c0_12 = arith.constant 0 : index
    %c0_13 = arith.constant 0 : index
    %15 = vector.load %arg6[%c0_12, %c0_13] : memref<32x32xf32, #tpu.memory_space<vmem>>, vector<32x32xf32>
    %cst_14 = arith.constant dense<0.000000e+00> : vector<32x8xf32>
    %16 = tpu.matmul %15, %14, %cst_14 {dimension_numbers = #tpu.dot_dimension_numbers<[1], [0], [0], [1], [0, 0, 1, 1], [], []>} : vector<32x32xf32>, vector<32x8xf32>, vector<32x8xf32> -> vector<32x8xf32>
    %c0_15 = arith.constant 0 : index
    %c0_16 = arith.constant 0 : index
    %17 = vector.load %arg7[%c0_15, %c0_16] : memref<32x1xf32, #tpu.memory_space<vmem>>, vector<32x1xf32>
    %18 = vector.broadcast %17 : vector<32x1xf32> to vector<32x8xf32>
    %19 = arith.addf %16, %18 : vector<32x8xf32>
    %cst_17 = arith.constant 0.000000e+00 : f32
    %20 = vector.broadcast %cst_17 : f32 to vector<32x8xf32>
    %21 = arith.maximumf %19, %20 : vector<32x8xf32>
    %c0_18 = arith.constant 0 : index
    %c0_19 = arith.constant 0 : index
    %22 = vector.load %arg8[%c0_18, %c0_19] : memref<1x32xf32, #tpu.memory_space<vmem>>, vector<1x32xf32>
    %cst_20 = arith.constant dense<0.000000e+00> : vector<1x8xf32>
    %23 = tpu.matmul %22, %21, %cst_20 {dimension_numbers = #tpu.dot_dimension_numbers<[1], [0], [0], [1], [0, 0, 1, 1], [], []>} : vector<1x32xf32>, vector<32x8xf32>, vector<1x8xf32> -> vector<1x8xf32>
    %c0_21 = arith.constant 0 : index
    %24 = memref.load %arg9[%c0_21] : memref<1xf32, #tpu.memory_space<smem>>
    %25 = vector.broadcast %24 : f32 to vector<1x8xf32>
    %26 = arith.addf %23, %25 : vector<1x8xf32>
    %c0_22 = arith.constant 0 : index
    %c0_23 = arith.constant 0 : index
    %27 = vector.load %arg10[%c0_22, %c0_23] : memref<1x8xf32, #tpu.memory_space<vmem>>, vector<1x8xf32>
    tpu.vector_store %arg10[%c0_22, %c0_23], %26 {strides = array<i32>} : memref<1x8xf32, #tpu.memory_space<vmem>>, vector<1x8xf32>,
    return
  }
  func.func @transform_0(%arg0: i32) -> (i32, i32) {
    %c0_i32 = arith.constant 0 : i32
    %c0_i32_0 = arith.constant 0 : i32
    return %c0_i32, %arg0 : i32, i32
  }
  func.func @transform_1(%arg0: i32) -> (i32, i32) {
    %c0_i32 = arith.constant 0 : i32
    %c0_i32_0 = arith.constant 0 : i32
    %c0_i32_1 = arith.constant 0 : i32
    return %c0_i32, %c0_i32_0 : i32, i32
  }
  func.func @transform_2(%arg0: i32) -> (i32, i32) {
    %c0_i32 = arith.constant 0 : i32
    %c0_i32_0 = arith.constant 0 : i32
    %c0_i32_1 = arith.constant 0 : i32
    return %c0_i32, %c0_i32_0 : i32, i32
  }
  func.func @transform_3(%arg0: i32) -> (i32, i32) {
    %c0_i32 = arith.constant 0 : i32
    %c0_i32_0 = arith.constant 0 : i32
    %c0_i32_1 = arith.constant 0 : i32
    return %c0_i32, %c0_i32_0 : i32, i32
  }
  func.func @transform_4(%arg0: i32) -> (i32, i32) {
    %c0_i32 = arith.constant 0 : i32
    %c0_i32_0 = arith.constant 0 : i32
    %c0_i32_1 = arith.constant 0 : i32
    return %c0_i32, %c0_i32_0 : i32, i32
  }
  func.func @transform_5(%arg0: i32) -> (i32, i32) {
    %c0_i32 = arith.constant 0 : i32
    %c0_i32_0 = arith.constant 0 : i32
    %c0_i32_1 = arith.constant 0 : i32
    return %c0_i32, %c0_i32_0 : i32, i32
  }
  func.func @transform_6(%arg0: i32) -> (i32, i32) {
    %c0_i32 = arith.constant 0 : i32
    %c0_i32_0 = arith.constant 0 : i32
    %c0_i32_1 = arith.constant 0 : i32
    return %c0_i32, %c0_i32_0 : i32, i32
  }
  func.func @transform_7(%arg0: i32) -> (i32, i32) {
    %c0_i32 = arith.constant 0 : i32
    %c0_i32_0 = arith.constant 0 : i32
    %c0_i32_1 = arith.constant 0 : i32
    return %c0_i32, %c0_i32_0 : i32, i32
  }
  func.func @transform_8(%arg0: i32) -> i32 {
    %c0_i32 = arith.constant 0 : i32
    %c0_i32_0 = arith.constant 0 : i32
    return %c0_i32 : i32
  }
  func.func @transform_9(%arg0: i32) -> (i32, i32) {
    %c0_i32 = arith.constant 0 : i32
    %c0_i32_0 = arith.constant 0 : i32
    return %c0_i32, %arg0 : i32, i32
  }
}

</mosaic_0001>

<llo_original>
// kernel: critic_forward.1
$region0: #{critic_forward.1}
  #allocation0 [shape = 'u32[]', space=smem, size = 0x4, offset = 0x4, fixed_abs, tag = 'smem constant byte address 0x4 - core index']
  #allocation1 [shape = 'u32[144,128]{1,0:T(1,128)}', space=vmem, size = 0x12000, scoped, tag = 'internal scratch']
  #allocation2 [shape = 'f32[1]{0:T(128)S(6)}', space=smem, size = 0x200, scoped, tag = 'scoped memory for critic_forward.1']
  %s0 = inlined_call_operand.vmem [shape: f32[16,8], index: 0, kind: input, shape index: {}]
  %s1 = inlined_call_operand.vmem [shape: f32[32,16], index: 1, kind: input, shape index: {}]
  %s2 = inlined_call_operand.vmem [shape: f32[32,1], index: 2, kind: input, shape index: {}]
  %s3 = inlined_call_operand.vmem [shape: f32[32,32], index: 3, kind: input, shape index: {}]
  %s4 = inlined_call_operand.vmem [shape: f32[32,1], index: 4, kind: input, shape index: {}]
  %s5 = inlined_call_operand.vmem [shape: f32[32,32], index: 5, kind: input, shape index: {}]
  %s6 = inlined_call_operand.vmem [shape: f32[32,1], index: 6, kind: input, shape index: {}]
  %s7 = inlined_call_operand.vmem [shape: f32[1,32], index: 7, kind: input, shape index: {}]
  %s8 = inlined_call_operand.<no memory space> [shape: f32[1], index: 8, kind: input, shape index: {}]
  %s9 = inlined_call_operand.hbm [shape: f32[1,8], index: 9, kind: output, shape index: {}]
  %s10 = sld [smem:[#allocation0]]
  $region46: #{critic_forward.1} parent=0
    _
  %s12 = ssub.s32 1, %s10
  %s13 = scalar_select 0, %s12, %s10
  %14 = sst [smem:[#allocation2]] %s8
  $region1: #{critic_forward.1} parent=0
    #allocation3 [shape = 'u8[512]{0}', space=vmem, size = 0x400, scoped, tag = 'output window, operand 0, single buffered']
    #allocation4 [shape = 's32[1]{0}', space=sflag, size = 0x4, scoped, tag = 'scoped memory for critic_forward.1']
    %15 = vsyncpa [#allocation4], 0
    // Predicated region
    $region2: #{critic_forward.1} parent=1 // pred_check
      _
    $region3: #{critic_forward.1} parent=1 // pred_check_branch
      %17 = sbr.rel (0) target = $region5
    $region4: #{critic_forward.1} parent=1 // pred_region
      _
    $region5: #{critic_forward.1} parent=1 // pred_fallthru
      _
    // Predicated region
    $region6: #{critic_forward.1} parent=1 // pred_check
      _
    $region7: #{critic_forward.1} parent=1 // pred_check_branch
      %19 = sbr.rel (0) target = $region9
    $region8: #{critic_forward.1} parent=1 // pred_region
      _
    $region9: #{critic_forward.1} parent=1 // pred_fallthru
      _
    // Predicated region
    $region10: #{critic_forward.1} parent=1 // pred_check
      _
    $region11: #{critic_forward.1} parent=1 // pred_check_branch
      %21 = sbr.rel (0) target = $region13
    $region12: #{critic_forward.1} parent=1 // pred_region
      _
    $region13: #{critic_forward.1} parent=1 // pred_fallthru
      _
    // Predicated region
    $region14: #{critic_forward.1} parent=1 // pred_check
      _
    $region15: #{critic_forward.1} parent=1 // pred_check_branch
      %23 = sbr.rel (0) target = $region17
    $region16: #{critic_forward.1} parent=1 // pred_region
      _
    $region17: #{critic_forward.1} parent=1 // pred_fallthru
      _
    // Predicated region
    $region18: #{critic_forward.1} parent=1 // pred_check
      _
    $region19: #{critic_forward.1} parent=1 // pred_check_branch
      %25 = sbr.rel (0) target = $region21
    $region20: #{critic_forward.1} parent=1 // pred_region
      _
    $region21: #{critic_forward.1} parent=1 // pred_fallthru
      _
    // Predicated region
    $region22: #{critic_forward.1} parent=1 // pred_check
      _
    $region23: #{critic_forward.1} parent=1 // pred_check_branch
      %27 = sbr.rel (0) target = $region25
    $region24: #{critic_forward.1} parent=1 // pred_region
      _
    $region25: #{critic_forward.1} parent=1 // pred_fallthru
      _
    // Predicated region
    $region26: #{critic_forward.1} parent=1 // pred_check
      _
    $region27: #{critic_forward.1} parent=1 // pred_check_branch
      %29 = sbr.rel (0) target = $region29
    $region28: #{critic_forward.1} parent=1 // pred_region
      _
    $region29: #{critic_forward.1} parent=1 // pred_fallthru
      _
    // Predicated region
    $region30: #{critic_forward.1} parent=1 // pred_check
      _
    $region31: #{critic_forward.1} parent=1 // pred_check_branch
      %31 = sbr.rel (0) target = $region33
    $region32: #{critic_forward.1} parent=1 // pred_region
      _
    $region33: #{critic_forward.1} parent=1 // pred_fallthru
      _
    // Predicated region
    $region34: #{critic_forward.1} parent=1 // pred_check
      _
    $region35: #{critic_forward.1} parent=1 // pred_check_branch
      %33 = sbr.rel (0) target = $region37
    $region36: #{critic_forward.1} parent=1 // pred_region
      _
    $region37: #{critic_forward.1} parent=1 // pred_fallthru
      _
    %v34 = vld [vmem:[%s0] sm:$0xff]
    %v35 = vld [vmem:[%s0 + $0x8] sm:$0xff]
    %v36 = vld [vmem:[%s1] sm:$0xff]
    %v37 = vld [vmem:[%s1 + $0x8] sm:$0xff]
    %v38 = vld [vmem:[%s1 + $0x10] sm:$0xff]
    %v39 = vld [vmem:[%s1 + $0x18] sm:$0xff]
    %v40 = vld [vmem:[%s2] sm:$0xff]
    %v41 = vld [vmem:[%s2 + $0x8] sm:$0xff]
    %v42 = vld [vmem:[%s2 + $0x10] sm:$0xff]
    %v43 = vld [vmem:[%s2 + $0x18] sm:$0xff]
    %45 = vset.pattern.permute.xlu0 0
    %46 = vperm.xlu0 %45, %v40
    %v47 = vpop.permute.xlu0 %46
    %50 = vset.pattern.permute.xlu0 0
    %51 = vperm.xlu0 %50, %v41
    %v52 = vpop.permute.xlu0 %51
    %55 = vset.pattern.permute.xlu0 0
    %56 = vperm.xlu0 %55, %v42
    %v57 = vpop.permute.xlu0 %56
    %60 = vset.pattern.permute.xlu0 0
    %61 = vperm.xlu0 %60, %v43
    %v62 = vpop.permute.xlu0 %61
    %vm64 = vcmask 130048
    %v66 = vsel %vm64, %v36, 0
    %v69 = vsel %vm64, %v37, 0
    %v72 = vsel %vm64, %v38, 0
    %v75 = vsel %vm64, %v39, 0
    %77 = vmatprep.subr.mxu0 0.0
    %78 = vmatpush1.msra.mxu0 %v34
    %79 = vmatprep.subr.mxu0 0.0
    %80 = vmatpush1.msra.mxu0 %v35
    %81 = vmatprep.subr.mxu0 0.0
    %82 = vmatpush1.msra.mxu0 0.0
    %83 = vmatprep.subr.mxu0 0.0
    %84 = vmatpush1.msra.mxu0 0.0
    %85 = vmatprep.subr.mxu0 0.0
    %86 = vmatpush1.msra.mxu0 0.0
    %87 = vmatprep.subr.mxu0 0.0
    %88 = vmatpush1.msra.mxu0 0.0
    %89 = vmatprep.subr.mxu0 0.0
    %90 = vmatpush1.msra.mxu0 0.0
    %91 = vmatprep.subr.mxu0 0.0
    %92 = vmatpush1.msra.mxu0 0.0
    %93 = vmatprep.subr.mxu0 0.0
    %94 = vmatpush1.msra.mxu0 0.0
    %95 = vmatprep.subr.mxu0 0.0
    %96 = vmatpush1.msra.mxu0 0.0
    %97 = vmatprep.subr.mxu0 0.0
    %98 = vmatpush1.msra.mxu0 0.0
    %99 = vmatprep.subr.mxu0 0.0
    %100 = vmatpush1.msra.mxu0 0.0
    %101 = vmatprep.subr.mxu0 0.0
    %102 = vmatpush1.msra.mxu0 0.0
    %103 = vmatprep.subr.mxu0 0.0
    %104 = vmatpush1.msra.mxu0 0.0
    %105 = vmatprep.subr.mxu0 0.0
    %106 = vmatpush1.msra.mxu0 0.0
    %107 = vmatprep.subr.mxu0 0.0
    %108 = vmatpush1.msra.mxu0 0.0
    %109 = vmatprep.subr.mxu0 0.0
    %110 = vmatpush1.msra.mxu0 0.0
    %111 = vmatprep.subr.mxu0 0.0
    %112 = vmatpush1.msra.mxu0 0.0
    %113 = vmatprep.subr.mxu0 0.0
    %114 = vmatpush1.msra.mxu0 0.0
    %115 = vmatprep.subr.mxu0 0.0
    %116 = vmatpush1.msra.mxu0 0.0
    %117 = vmatprep.subr.mxu0 0.0
    %118 = vmatpush1.msra.mxu0 0.0
    %119 = vmatprep.subr.mxu0 0.0
    %120 = vmatpush1.msra.mxu0 0.0
    %121 = vmatprep.subr.mxu0 0.0
    %122 = vmatpush1.msra.mxu0 0.0
    %123 = vmatprep.subr.mxu0 0.0
    %124 = vmatpush1.msra.mxu0 0.0
    %125 = vmatprep.subr.mxu0 0.0
    %126 = vmatpush1.msra.mxu0 0.0
    %127 = vmatprep.subr.mxu0 0.0
    %128 = vmatpush1.msra.mxu0 0.0
    %129 = vmatprep.subr.mxu0 0.0
    %130 = vmatpush1.msra.mxu0 0.0
    %131 = vmatprep.subr.mxu0 0.0
    %132 = vmatpush1.msra.mxu0 0.0
    %133 = vmatprep.subr.mxu0 0.0
    %134 = vmatpush1.msra.mxu0 0.0
    %135 = vmatprep.subr.mxu0 0.0
    %136 = vmatpush1.msra.mxu0 0.0
    %137 = vmatprep.subr.mxu0 0.0
    %138 = vmatpush1.msra.mxu0 0.0
    %139 = vmatprep.subr.mxu0 0.0
    %140 = vmatpush1.msra.mxu0 0.0
    %141 = vmatprep.mubr.f32.mxu0 0.0
    %142 = vmatmul.mubr.f32.gmra.mrb[0].mxu0 %v66
    %v143 = vpop.f32.mrb[0].mxu0
    %v144 = vadd.f32 %v47, %v143
    %v145 = vpop.f32.mrb[0].mxu0
    %146 = vmatprep.mubr.f32.mxu0 0.0
    %147 = vmatmul.mubr.f32.gmra.mrb[0].mxu0 %v69
    %v148 = vpop.f32.mrb[0].mxu0
    %v149 = vadd.f32 %v52, %v148
    %v150 = vpop.f32.mrb[0].mxu0
    %151 = vmatprep.mubr.f32.mxu0 0.0
    %152 = vmatmul.mubr.f32.gmra.mrb[0].mxu0 %v72
    %v153 = vpop.f32.mrb[0].mxu0
    %v154 = vadd.f32 %v57, %v153
    %v155 = vpop.f32.mrb[0].mxu0
    %156 = vmatprep.mubr.f32.mxu0 0.0
    %157 = vmatmul.mubr.f32.gmra.mrb[0].mxu0 %v75
    %v158 = vpop.f32.mrb[0].mxu0
    %v159 = vadd.f32 %v62, %v158
    %v160 = vpop.f32.mrb[0].mxu0
    %161 = vdwg.mxu0
    %v162 = vmax.f32 %v144, 0.0
    %v163 = vmax.f32 %v149, 0.0
    %v164 = vmax.f32 %v154, 0.0
    %v165 = vmax.f32 %v159, 0.0
    %v166 = vld [vmem:[%s3] sm:$0xff]
    %v167 = vld [vmem:[%s3 + $0x8] sm:$0xff]
    %v168 = vld [vmem:[%s3 + $0x10] sm:$0xff]
    %v169 = vld [vmem:[%s3 + $0x18] sm:$0xff]
    %v170 = vld [vmem:[%s4] sm:$0xff]
    %v171 = vld [vmem:[%s4 + $0x8] sm:$0xff]
    %v172 = vld [vmem:[%s4 + $0x10] sm:$0xff]
    %v173 = vld [vmem:[%s4 + $0x18] sm:$0xff]
    %175 = vset.pattern.permute.xlu0 0
    %176 = vperm.xlu0 %175, %v170
    %v177 = vpop.permute.xlu0 %176
    %180 = vset.pattern.permute.xlu0 0
    %181 = vperm.xlu0 %180, %v171
    %v182 = vpop.permute.xlu0 %181
    %185 = vset.pattern.permute.xlu0 0
    %186 = vperm.xlu0 %185, %v172
    %v187 = vpop.permute.xlu0 %186
    %190 = vset.pattern.permute.xlu0 0
    %191 = vperm.xlu0 %190, %v173
    %v192 = vpop.permute.xlu0 %191
    %vm194 = vcmask 261120
    %v196 = vsel %vm194, %v166, 0
    %v199 = vsel %vm194, %v167, 0
    %v202 = vsel %vm194, %v168, 0
    %v205 = vsel %vm194, %v169, 0
    %207 = vmatprep.subr.mxu0 0.0
    %208 = vmatpush1.msra.mxu0 %v162
    %209 = vmatprep.subr.mxu0 0.0
    %210 = vmatpush1.msra.mxu0 %v163
    %211 = vmatprep.subr.mxu0 0.0
    %212 = vmatpush1.msra.mxu0 %v164
    %213 = vmatprep.subr.mxu0 0.0
    %214 = vmatpush1.msra.mxu0 %v165
    %215 = vmatprep.subr.mxu0 0.0
    %216 = vmatpush1.msra.mxu0 0.0
    %217 = vmatprep.subr.mxu0 0.0
    %218 = vmatpush1.msra.mxu0 0.0
    %219 = vmatprep.subr.mxu0 0.0
    %220 = vmatpush1.msra.mxu0 0.0
    %221 = vmatprep.subr.mxu0 0.0
    %222 = vmatpush1.msra.mxu0 0.0
    %223 = vmatprep.subr.mxu0 0.0
    %224 = vmatpush1.msra.mxu0 0.0
    %225 = vmatprep.subr.mxu0 0.0
    %226 = vmatpush1.msra.mxu0 0.0
    %227 = vmatprep.subr.mxu0 0.0
    %228 = vmatpush1.msra.mxu0 0.0
    %229 = vmatprep.subr.mxu0 0.0
    %230 = vmatpush1.msra.mxu0 0.0
    %231 = vmatprep.subr.mxu0 0.0
    %232 = vmatpush1.msra.mxu0 0.0
    %233 = vmatprep.subr.mxu0 0.0
    %234 = vmatpush1.msra.mxu0 0.0
    %235 = vmatprep.subr.mxu0 0.0
    %236 = vmatpush1.msra.mxu0 0.0
    %237 = vmatprep.subr.mxu0 0.0
    %238 = vmatpush1.msra.mxu0 0.0
    %239 = vmatprep.subr.mxu0 0.0
    %240 = vmatpush1.msra.mxu0 0.0
    %241 = vmatprep.subr.mxu0 0.0
    %242 = vmatpush1.msra.mxu0 0.0
    %243 = vmatprep.subr.mxu0 0.0
    %244 = vmatpush1.msra.mxu0 0.0
    %245 = vmatprep.subr.mxu0 0.0
    %246 = vmatpush1.msra.mxu0 0.0
    %247 = vmatprep.subr.mxu0 0.0
    %248 = vmatpush1.msra.mxu0 0.0
    %249 = vmatprep.subr.mxu0 0.0
    %250 = vmatpush1.msra.mxu0 0.0
    %251 = vmatprep.subr.mxu0 0.0
    %252 = vmatpush1.msra.mxu0 0.0
    %253 = vmatprep.subr.mxu0 0.0
    %254 = vmatpush1.msra.mxu0 0.0
    %255 = vmatprep.subr.mxu0 0.0
    %256 = vmatpush1.msra.mxu0 0.0
    %257 = vmatprep.subr.mxu0 0.0
    %258 = vmatpush1.msra.mxu0 0.0
    %259 = vmatprep.subr.mxu0 0.0
    %260 = vmatpush1.msra.mxu0 0.0
    %261 = vmatprep.subr.mxu0 0.0
    %262 = vmatpush1.msra.mxu0 0.0
    %263 = vmatprep.subr.mxu0 0.0
    %264 = vmatpush1.msra.mxu0 0.0
    %265 = vmatprep.subr.mxu0 0.0
    %266 = vmatpush1.msra.mxu0 0.0
    %267 = vmatprep.subr.mxu0 0.0
    %268 = vmatpush1.msra.mxu0 0.0
    %269 = vmatprep.subr.mxu0 0.0
    %270 = vmatpush1.msra.mxu0 0.0
    %271 = vmatprep.mubr.f32.mxu0 0.0
    %272 = vmatmul.mubr.f32.gmra.mrb[0].mxu0 %v196
    %v273 = vpop.f32.mrb[0].mxu0
    %v274 = vadd.f32 %v177, %v273
    %v275 = vpop.f32.mrb[0].mxu0
    %276 = vmatprep.mubr.f32.mxu0 0.0
    %277 = vmatmul.mubr.f32.gmra.mrb[0].mxu0 %v199
    %v278 = vpop.f32.mrb[0].mxu0
    %v279 = vadd.f32 %v182, %v278
    %v280 = vpop.f32.mrb[0].mxu0
    %281 = vmatprep.mubr.f32.mxu0 0.0
    %282 = vmatmul.mubr.f32.gmra.mrb[0].mxu0 %v202
    %v283 = vpop.f32.mrb[0].mxu0
    %v284 = vadd.f32 %v187, %v283
    %v285 = vpop.f32.mrb[0].mxu0
    %286 = vmatprep.mubr.f32.mxu0 0.0
    %287 = vmatmul.mubr.f32.gmra.mrb[0].mxu0 %v205
    %v288 = vpop.f32.mrb[0].mxu0
    %v289 = vadd.f32 %v192, %v288
    %v290 = vpop.f32.mrb[0].mxu0
    %291 = vdwg.mxu0
    %v292 = vmax.f32 %v274, 0.0
    %v293 = vmax.f32 %v279, 0.0
    %v294 = vmax.f32 %v284, 0.0
    %v295 = vmax.f32 %v289, 0.0
    %v296 = vld [vmem:[%s5] sm:$0xff]
    %v297 = vld [vmem:[%s5 + $0x8] sm:$0xff]
    %v298 = vld [vmem:[%s5 + $0x10] sm:$0xff]
    %v299 = vld [vmem:[%s5 + $0x18] sm:$0xff]
    %v300 = vld [vmem:[%s6] sm:$0xff]
    %v301 = vld [vmem:[%s6 + $0x8] sm:$0xff]
    %v302 = vld [vmem:[%s6 + $0x10] sm:$0xff]
    %v303 = vld [vmem:[%s6 + $0x18] sm:$0xff]
    %305 = vset.pattern.permute.xlu0 0
    %306 = vperm.xlu0 %305, %v300
    %v307 = vpop.permute.xlu0 %306
    %310 = vset.pattern.permute.xlu0 0
    %311 = vperm.xlu0 %310, %v301
    %v312 = vpop.permute.xlu0 %311
    %315 = vset.pattern.permute.xlu0 0
    %316 = vperm.xlu0 %315, %v302
    %v317 = vpop.permute.xlu0 %316
    %320 = vset.pattern.permute.xlu0 0
    %321 = vperm.xlu0 %320, %v303
    %v322 = vpop.permute.xlu0 %321
    %v325 = vsel %vm194, %v296, 0
    %v328 = vsel %vm194, %v297, 0
    %v331 = vsel %vm194, %v298, 0
    %v334 = vsel %vm194, %v299, 0
    %336 = vmatprep.subr.mxu0 0.0
    %337 = vmatpush1.msra.mxu0 %v292
    %338 = vmatprep.subr.mxu0 0.0
    %339 = vmatpush1.msra.mxu0 %v293
    %340 = vmatprep.subr.mxu0 0.0
    %341 = vmatpush1.msra.mxu0 %v294
    %342 = vmatprep.subr.mxu0 0.0
    %343 = vmatpush1.msra.mxu0 %v295
    %344 = vmatprep.subr.mxu0 0.0
    %345 = vmatpush1.msra.mxu0 0.0
    %346 = vmatprep.subr.mxu0 0.0
    %347 = vmatpush1.msra.mxu0 0.0
    %348 = vmatprep.subr.mxu0 0.0
    %349 = vmatpush1.msra.mxu0 0.0
    %350 = vmatprep.subr.mxu0 0.0
    %351 = vmatpush1.msra.mxu0 0.0
    %352 = vmatprep.subr.mxu0 0.0
    %353 = vmatpush1.msra.mxu0 0.0
    %354 = vmatprep.subr.mxu0 0.0
    %355 = vmatpush1.msra.mxu0 0.0
    %356 = vmatprep.subr.mxu0 0.0
    %357 = vmatpush1.msra.mxu0 0.0
    %358 = vmatprep.subr.mxu0 0.0
    %359 = vmatpush1.msra.mxu0 0.0
    %360 = vmatprep.subr.mxu0 0.0
    %361 = vmatpush1.msra.mxu0 0.0
    %362 = vmatprep.subr.mxu0 0.0
    %363 = vmatpush1.msra.mxu0 0.0
    %364 = vmatprep.subr.mxu0 0.0
    %365 = vmatpush1.msra.mxu0 0.0
    %366 = vmatprep.subr.mxu0 0.0
    %367 = vmatpush1.msra.mxu0 0.0
    %368 = vmatprep.subr.mxu0 0.0
    %369 = vmatpush1.msra.mxu0 0.0
    %370 = vmatprep.subr.mxu0 0.0
    %371 = vmatpush1.msra.mxu0 0.0
    %372 = vmatprep.subr.mxu0 0.0
    %373 = vmatpush1.msra.mxu0 0.0
    %374 = vmatprep.subr.mxu0 0.0
    %375 = vmatpush1.msra.mxu0 0.0
    %376 = vmatprep.subr.mxu0 0.0
    %377 = vmatpush1.msra.mxu0 0.0
    %378 = vmatprep.subr.mxu0 0.0
    %379 = vmatpush1.msra.mxu0 0.0
    %380 = vmatprep.subr.mxu0 0.0
    %381 = vmatpush1.msra.mxu0 0.0
    %382 = vmatprep.subr.mxu0 0.0
    %383 = vmatpush1.msra.mxu0 0.0
    %384 = vmatprep.subr.mxu0 0.0
    %385 = vmatpush1.msra.mxu0 0.0
    %386 = vmatprep.subr.mxu0 0.0
    %387 = vmatpush1.msra.mxu0 0.0
    %388 = vmatprep.subr.mxu0 0.0
    %389 = vmatpush1.msra.mxu0 0.0
    %390 = vmatprep.subr.mxu0 0.0
    %391 = vmatpush1.msra.mxu0 0.0
    %392 = vmatprep.subr.mxu0 0.0
    %393 = vmatpush1.msra.mxu0 0.0
    %394 = vmatprep.subr.mxu0 0.0
    %395 = vmatpush1.msra.mxu0 0.0
    %396 = vmatprep.subr.mxu0 0.0
    %397 = vmatpush1.msra.mxu0 0.0
    %398 = vmatprep.subr.mxu0 0.0
    %399 = vmatpush1.msra.mxu0 0.0
    %400 = vmatprep.mubr.f32.mxu0 0.0
    %401 = vmatmul.mubr.f32.gmra.mrb[0].mxu0 %v325
    %v402 = vpop.f32.mrb[0].mxu0
    %v403 = vadd.f32 %v307, %v402
    %v404 = vpop.f32.mrb[0].mxu0
    %405 = vmatprep.mubr.f32.mxu0 0.0
    %406 = vmatmul.mubr.f32.gmra.mrb[0].mxu0 %v328
    %v407 = vpop.f32.mrb[0].mxu0
    %v408 = vadd.f32 %v312, %v407
    %v409 = vpop.f32.mrb[0].mxu0
    %410 = vmatprep.mubr.f32.mxu0 0.0
    %411 = vmatmul.mubr.f32.gmra.mrb[0].mxu0 %v331
    %v412 = vpop.f32.mrb[0].mxu0
    %v413 = vadd.f32 %v317, %v412
    %v414 = vpop.f32.mrb[0].mxu0
    %415 = vmatprep.mubr.f32.mxu0 0.0
    %416 = vmatmul.mubr.f32.gmra.mrb[0].mxu0 %v334
    %v417 = vpop.f32.mrb[0].mxu0
    %v418 = vadd.f32 %v322, %v417
    %v419 = vpop.f32.mrb[0].mxu0
    %420 = vdwg.mxu0
    %v421 = vmax.f32 %v403, 0.0
    %v422 = vmax.f32 %v408, 0.0
    %v423 = vmax.f32 %v413, 0.0
    %v424 = vmax.f32 %v418, 0.0
    %v425 = vld [vmem:[%s7] sm:$0x1]
    %s426 = sld [smem:[#allocation2]]
    %v427 = vstv %s426
    %v429 = vsel %vm194, %v425, 0
    %431 = vmatprep.subr.mxu0 0.0
    %432 = vmatpush1.msra.mxu0 %v421
    %433 = vmatprep.subr.mxu0 0.0
    %434 = vmatpush1.msra.mxu0 %v422
    %435 = vmatprep.subr.mxu0 0.0
    %436 = vmatpush1.msra.mxu0 %v423
    %437 = vmatprep.subr.mxu0 0.0
    %438 = vmatpush1.msra.mxu0 %v424
    %439 = vmatprep.subr.mxu0 0.0
    %440 = vmatpush1.msra.mxu0 0.0
    %441 = vmatprep.subr.mxu0 0.0
    %442 = vmatpush1.msra.mxu0 0.0
    %443 = vmatprep.subr.mxu0 0.0
    %444 = vmatpush1.msra.mxu0 0.0
    %445 = vmatprep.subr.mxu0 0.0
    %446 = vmatpush1.msra.mxu0 0.0
    %447 = vmatprep.subr.mxu0 0.0
    %448 = vmatpush1.msra.mxu0 0.0
    %449 = vmatprep.subr.mxu0 0.0
    %450 = vmatpush1.msra.mxu0 0.0
    %451 = vmatprep.subr.mxu0 0.0
    %452 = vmatpush1.msra.mxu0 0.0
    %453 = vmatprep.subr.mxu0 0.0
    %454 = vmatpush1.msra.mxu0 0.0
    %455 = vmatprep.subr.mxu0 0.0
    %456 = vmatpush1.msra.mxu0 0.0
    %457 = vmatprep.subr.mxu0 0.0
    %458 = vmatpush1.msra.mxu0 0.0
    %459 = vmatprep.subr.mxu0 0.0
    %460 = vmatpush1.msra.mxu0 0.0
    %461 = vmatprep.subr.mxu0 0.0
    %462 = vmatpush1.msra.mxu0 0.0
    %463 = vmatprep.subr.mxu0 0.0
    %464 = vmatpush1.msra.mxu0 0.0
    %465 = vmatprep.subr.mxu0 0.0
    %466 = vmatpush1.msra.mxu0 0.0
    %467 = vmatprep.subr.mxu0 0.0
    %468 = vmatpush1.msra.mxu0 0.0
    %469 = vmatprep.subr.mxu0 0.0
    %470 = vmatpush1.msra.mxu0 0.0
    %471 = vmatprep.subr.mxu0 0.0
    %472 = vmatpush1.msra.mxu0 0.0
    %473 = vmatprep.subr.mxu0 0.0
    %474 = vmatpush1.msra.mxu0 0.0
    %475 = vmatprep.subr.mxu0 0.0
    %476 = vmatpush1.msra.mxu0 0.0
    %477 = vmatprep.subr.mxu0 0.0
    %478 = vmatpush1.msra.mxu0 0.0
    %479 = vmatprep.subr.mxu0 0.0
    %480 = vmatpush1.msra.mxu0 0.0
    %481 = vmatprep.subr.mxu0 0.0
    %482 = vmatpush1.msra.mxu0 0.0
    %483 = vmatprep.subr.mxu0 0.0
    %484 = vmatpush1.msra.mxu0 0.0
    %485 = vmatprep.subr.mxu0 0.0
    %486 = vmatpush1.msra.mxu0 0.0
    %487 = vmatprep.subr.mxu0 0.0
    %488 = vmatpush1.msra.mxu0 0.0
    %489 = vmatprep.subr.mxu0 0.0
    %490 = vmatpush1.msra.mxu0 0.0
    %491 = vmatprep.subr.mxu0 0.0
    %492 = vmatpush1.msra.mxu0 0.0
    %493 = vmatprep.subr.mxu0 0.0
    %494 = vmatpush1.msra.mxu0 0.0
    %495 = vmatprep.mubr.f32.mxu0 0.0
    %496 = vmatmul.mubr.f32.gmra.mrb[0].mxu0 %v429
    %v497 = vpop.f32.mrb[0].mxu0
    %v498 = vadd.f32 %v427, %v497
    %v499 = vpop.f32.mrb[0].mxu0
    %500 = vdwg.mxu0
    %vm501 = vcmask 57344
    %502 = vst.msk [vmem:[#allocation3] sm:$0x1] %vm501, %v498
    // Predicated region
    $region38: #{critic_forward.1} parent=1 // pred_check
      _
    $region39: #{critic_forward.1} parent=1 // pred_check_branch
      %504 = sbr.rel (0) target = $region41
    $region40: #{critic_forward.1} parent=1 // pred_region
      %s506 = ssub.s32 16, 16
      %507 = vsyncadd [#allocation4], %s506
      %s509 = sshll.u32 [#allocation3], 4
      %s510 = int_to_ptr.vmem [resolvable:$true] %s509
      %512 = dma.vmem_to_hbm [thread:$0]  %s510, 16, %s9, [#allocation4]
    $region41: #{critic_forward.1} parent=1 // pred_fallthru
      _
    // Predicated region
    $region42: #{critic_forward.1} parent=1 // pred_check
      _
    $region43: #{critic_forward.1} parent=1 // pred_check_branch
      %514 = sbr.rel (0) target = $region45
    $region44: #{critic_forward.1} parent=1 // pred_region
      %515 = dma.done [#allocation4], 16
    $region45: #{critic_forward.1} parent=1 // pred_fallthru
      _
    %516 = vsyncpa [#allocation4], 1

</llo_original>
